<compile_context>
chip_gen: v7x
topology: tpu7x:2x2x1
jax: 0.10.0
libtpu: 0.0.40
codegen_flags: <defaults>
</compile_context>

<pallas_src>
import math

import jax
import jax.numpy as jnp
from jax.experimental import pallas as pl
from jax.experimental.pallas import tpu as pltpu

_HIDDEN = 256
_LANE = 128


def _round_up(x: int, m: int) -> int:
    return (x + m - 1) // m * m


def _pick_batch_tile(batch: int, batch_tile: int) -> int:
    """Batch tile: multiple of 8 sublanes, capped at batch_tile.

    For large single-tile batches, split into >= 2 grid steps so the
    'parallel' axis actually shards across v7x's two TensorCores; below ~1024
    rows the ~0.35 us per-grid-step overhead outweighs the split.
    """
    b8 = _round_up(batch, 8)
    if b8 > batch_tile:
        return batch_tile
    if batch >= 1024:
        return _round_up((b8 + 1) // 2, 8)
    return b8


def _actor_kernel(max_action: float, compute_dtype):
    """Fused Linear->ReLU->Linear->ReLU->Linear->Tanh->scale on one batch tile."""

    def kernel(x_ref, w1_ref, b1_ref, w2_ref, b2_ref, w3_ref, b3_ref, o_ref):
        x = x_ref[...].astype(compute_dtype)                              # (TB, S)
        h = jnp.dot(x, w1_ref[...], preferred_element_type=jnp.float32)   # (TB, 256)
        h = jnp.maximum(h + b1_ref[...], 0.0)
        h = jnp.dot(h.astype(compute_dtype), w2_ref[...],
                    preferred_element_type=jnp.float32)                   # (TB, 256)
        h = jnp.maximum(h + b2_ref[...], 0.0)
        h = jnp.dot(h.astype(compute_dtype), w3_ref[...],
                    preferred_element_type=jnp.float32)                   # (TB, A_pad)
        h = h + b3_ref[...]
        o_ref[...] = (max_action * jnp.tanh(h)).astype(o_ref.dtype)

    return kernel


def prepare_actor_params(params, *, use_bf16=True):
    """Pad / cast raw params into kernel-ready form.

    Call ONCE per parameter update (hoisted out of the per-step forward): the
    only padded tensors are w3/b3 (output lanes -> 128); weights are cast to
    the MXU operand dtype, biases stay f32 (added post-accumulation).
    """
    w1, b1, w2, b2, w3, b3 = params
    state_dim, hidden = w1.shape
    action_dim = w3.shape[1]
    a_pad = _round_up(action_dim, _LANE)
    compute_dtype = jnp.bfloat16 if use_bf16 else jnp.float32

    w3p = jnp.zeros((hidden, a_pad), jnp.float32).at[:, :action_dim].set(w3)
    b3p = jnp.zeros((1, a_pad), jnp.float32).at[:, :action_dim].set(b3)

    prepared = (
        w1.astype(compute_dtype), b1.astype(jnp.float32),
        w2.astype(compute_dtype), b2.astype(jnp.float32),
        w3p.astype(compute_dtype), b3p.astype(jnp.float32),
    )
    meta = dict(state_dim=state_dim, hidden=hidden, action_dim=action_dim,
                a_pad=a_pad, compute_dtype=compute_dtype)
    return prepared, meta


def actor_forward(state, prepared, meta, max_action, *, batch_tile=2048):
    """state: (B, state_dim) f32 -> (B, action_dim) f32."""
    w1, b1, w2, b2, w3p, b3p = prepared
    batch, state_dim = state.shape
    assert state_dim == meta["state_dim"]
    hidden = meta["hidden"]
    action_dim = meta["action_dim"]
    a_pad = meta["a_pad"]
    compute_dtype = meta["compute_dtype"]

    tb = _pick_batch_tile(batch, batch_tile)
    b_pad = _round_up(batch, tb)

    # Only the batch (sublane) axis ever needs padding now, and only when the
    # tile does not divide it; padded rows are sliced away below.
    x = state
    if b_pad != batch:
        x = jnp.zeros((b_pad, state_dim), jnp.float32).at[:batch].set(state)

    grid = (b_pad // tb,)
    const = lambda i: (0, 0)   # weights/biases: same block every step -> VMEM resident
    row = lambda i: (i, 0)     # state/out: tiled along batch (double-buffered)

    in_bytes = (int(x.size) * x.dtype.itemsize
                + sum(int(a.size) * a.dtype.itemsize for a in prepared))
    cost = pl.CostEstimate(
        flops=2 * b_pad * (state_dim * hidden + hidden * hidden + hidden * a_pad),
        transcendentals=b_pad * a_pad,
        bytes_accessed=in_bytes + b_pad * a_pad * 4,
    )

    out = pl.pallas_call(
        _actor_kernel(float(max_action), compute_dtype),
        out_shape=jax.ShapeDtypeStruct((b_pad, a_pad), jnp.float32),
        grid=grid,
        in_specs=[
            pl.BlockSpec((tb, state_dim), row),        # state tile, unpadded lanes
            pl.BlockSpec((state_dim, hidden), const),  # w1 (17x256, half MXU array)
            pl.BlockSpec((1, hidden), const),          # b1
            pl.BlockSpec((hidden, hidden), const),     # w2 (256x256 MXU tile)
            pl.BlockSpec((1, hidden), const),          # b2
            pl.BlockSpec((hidden, a_pad), const),      # w3 (lane-padded once at prep)
            pl.BlockSpec((1, a_pad), const),           # b3
        ],
        out_specs=pl.BlockSpec((tb, a_pad), row),      # lane-dense output slab
        compiler_params=pltpu.CompilerParams(dimension_semantics=("parallel",)),
        cost_estimate=cost,
    )(x, w1, b1, w2, b2, w3p, b3p)

    return out[:batch, :action_dim]


def init_actor_params(key, state_dim, action_dim, hidden=_HIDDEN):
    """PyTorch nn.Linear default init (U[-1/sqrt(fan_in), 1/sqrt(fan_in)]).

    Weights stored transposed: (in_features, out_features); biases (1, out)."""
    keys = jax.random.split(key, 6)

    def linear(kw, kb, fan_in, fan_out):
        bound = 1.0 / math.sqrt(fan_in)
        w = jax.random.uniform(kw, (fan_in, fan_out), jnp.float32, -bound, bound)
        b = jax.random.uniform(kb, (1, fan_out), jnp.float32, -bound, bound)
        return w, b

    w1, b1 = linear(keys[0], keys[1], state_dim, hidden)
    w2, b2 = linear(keys[2], keys[3], hidden, hidden)
    w3, b3 = linear(keys[4], keys[5], hidden, action_dim)
    return (w1, b1, w2, b2, w3, b3)


def actor_reference(state, params, max_action):
    """Pure-JAX f32 reference."""
    w1, b1, w2, b2, w3, b3 = params
    h = jnp.maximum(state @ w1 + b1, 0.0)
    h = jnp.maximum(h @ w2 + b2, 0.0)
    return max_action * jnp.tanh(h @ w3 + b3)


if __name__ == "__main__":
    key = jax.random.PRNGKey(0)
    k_params, k_s1, k_s2, k_s3 = jax.random.split(key, 4)

    state_dim = 17      # HalfCheetah-like observation dim
    action_dim = 6
    max_action = 1.0

    params = init_actor_params(k_params, state_dim, action_dim)

    # Weight prep hoisted out of the forward: prepare once, reuse across calls.
    prep_f32, meta_f32 = prepare_actor_params(params, use_bf16=False)
    prep_bf16, meta_bf16 = prepare_actor_params(params, use_bf16=True)

    # Small batch, f32 path (tight tolerance).
    s1 = jax.random.normal(k_s1, (8, state_dim), jnp.float32)
    o1 = jax.block_until_ready(actor_forward(s1, prep_f32, meta_f32, max_action))
    r1 = actor_reference(s1, params, max_action)
    assert o1.shape == (8, action_dim)
    assert jnp.allclose(o1, r1, atol=1e-5, rtol=1e-5), "f32 mismatch vs reference"

    # Ragged batch with a small tile: exercises multi-step grid + row padding.
    s2 = jax.random.normal(k_s2, (37, state_dim), jnp.float32)
    o2 = jax.block_until_ready(
        actor_forward(s2, prep_f32, meta_f32, max_action, batch_tile=16))
    r2 = actor_reference(s2, params, max_action)
    assert o2.shape == (37, action_dim)
    assert jnp.allclose(o2, r2, atol=1e-5, rtol=1e-5), "ragged-batch mismatch"

    # bf16 MXU fast path (default production path on v5e/v6e/v7x), loose tol.
    s3 = jax.random.normal(k_s3, (64, state_dim), jnp.float32)
    o3 = jax.block_until_ready(actor_forward(s3, prep_bf16, meta_bf16, max_action))
    r3 = actor_reference(s3, params, max_action)
    assert o3.shape == (64, action_dim)
    assert jnp.allclose(o3, r3, atol=2e-2, rtol=2e-2), "bf16 mismatch"

    print("KERNEL_OK")
</pallas_src>

<mosaic_0001>
module attributes {stable_mosaic.version = 11 : i64} {
  func.func @kernel(%arg0: i32, %arg1: memref<8x17xf32, #tpu.memory_space<vmem>>, %arg2: memref<17x256xf32, #tpu.memory_space<vmem>>, %arg3: memref<1x256xf32, #tpu.memory_space<vmem>>, %arg4: memref<256x256xf32, #tpu.memory_space<vmem>>, %arg5: memref<1x256xf32, #tpu.memory_space<vmem>>, %arg6: memref<256x128xf32, #tpu.memory_space<vmem>>, %arg7: memref<1x128xf32, #tpu.memory_space<vmem>>, %arg8: memref<8x128xf32, #tpu.memory_space<vmem>>) attributes {dimension_semantics = [#tpu.dimension_semantics<parallel>], iteration_bounds = array<i64: 1>, scalar_prefetch = 0 : i64, scratch_operands = 0 : i64, tpu.core_type = #tpu.core_type<tc>, window_params = [{transform_indices = @transform_0, window_bounds = array<i64: 8, 17>}, {pipeline_mode = #tpu.pipeline_mode<synchronous>, transform_indices = @transform_1, window_bounds = array<i64: 17, 256>}, {pipeline_mode = #tpu.pipeline_mode<synchronous>, transform_indices = @transform_2, window_bounds = array<i64: 1, 256>}, {pipeline_mode = #tpu.pipeline_mode<synchronous>, transform_indices = @transform_3, window_bounds = array<i64: 256, 256>}, {pipeline_mode = #tpu.pipeline_mode<synchronous>, transform_indices = @transform_4, window_bounds = array<i64: 1, 256>}, {pipeline_mode = #tpu.pipeline_mode<synchronous>, transform_indices = @transform_5, window_bounds = array<i64: 256, 128>}, {pipeline_mode = #tpu.pipeline_mode<synchronous>, transform_indices = @transform_6, window_bounds = array<i64: 1, 128>}, {transform_indices = @transform_7, window_bounds = array<i64: 8, 128>}]} {
    %c0 = arith.constant 0 : index
    %c0_0 = arith.constant 0 : index
    %0 = vector.load %arg1[%c0, %c0_0] : memref<8x17xf32, #tpu.memory_space<vmem>>, vector<8x17xf32>
    %c0_1 = arith.constant 0 : index
    %c0_2 = arith.constant 0 : index
    %1 = vector.load %arg2[%c0_1, %c0_2] : memref<17x256xf32, #tpu.memory_space<vmem>>, vector<17x256xf32>
    %cst = arith.constant dense<0.000000e+00> : vector<8x256xf32>
    %2 = tpu.matmul %0, %1, %cst {dimension_numbers = #tpu.dot_dimension_numbers<[1], [0], [0], [1], [0, 0, 1, 1], [], []>} : vector<8x17xf32>, vector<17x256xf32>, vector<8x256xf32> -> vector<8x256xf32>
    %c0_3 = arith.constant 0 : index
    %c0_4 = arith.constant 0 : index
    %3 = vector.load %arg3[%c0_3, %c0_4] : memref<1x256xf32, #tpu.memory_space<vmem>>, vector<1x256xf32>
    %4 = vector.broadcast %3 : vector<1x256xf32> to vector<8x256xf32>
    %5 = arith.addf %2, %4 : vector<8x256xf32>
    %cst_5 = arith.constant 0.000000e+00 : f32
    %6 = vector.broadcast %cst_5 : f32 to vector<8x256xf32>
    %7 = arith.maximumf %5, %6 : vector<8x256xf32>
    %c0_6 = arith.constant 0 : index
    %c0_7 = arith.constant 0 : index
    %8 = vector.load %arg4[%c0_6, %c0_7] : memref<256x256xf32, #tpu.memory_space<vmem>>, vector<256x256xf32>
    %cst_8 = arith.constant dense<0.000000e+00> : vector<8x256xf32>
    %9 = tpu.matmul %7, %8, %cst_8 {dimension_numbers = #tpu.dot_dimension_numbers<[1], [0], [0], [1], [0, 0, 1, 1], [], []>} : vector<8x256xf32>, vector<256x256xf32>, vector<8x256xf32> -> vector<8x256xf32>
    %c0_9 = arith.constant 0 : index
    %c0_10 = arith.constant 0 : index
    %10 = vector.load %arg5[%c0_9, %c0_10] : memref<1x256xf32, #tpu.memory_space<vmem>>, vector<1x256xf32>
    %11 = vector.broadcast %10 : vector<1x256xf32> to vector<8x256xf32>
    %12 = arith.addf %9, %11 : vector<8x256xf32>
    %cst_11 = arith.constant 0.000000e+00 : f32
    %13 = vector.broadcast %cst_11 : f32 to vector<8x256xf32>
    %14 = arith.maximumf %12, %13 : vector<8x256xf32>
    %c0_12 = arith.constant 0 : index
    %c0_13 = arith.constant 0 : index
    %15 = vector.load %arg6[%c0_12, %c0_13] : memref<256x128xf32, #tpu.memory_space<vmem>>, vector<256x128xf32>
    %cst_14 = arith.constant dense<0.000000e+00> : vector<8x128xf32>
    %16 = tpu.matmul %14, %15, %cst_14 {dimension_numbers = #tpu.dot_dimension_numbers<[1], [0], [0], [1], [0, 0, 1, 1], [], []>} : vector<8x256xf32>, vector<256x128xf32>, vector<8x128xf32> -> vector<8x128xf32>
    %c0_15 = arith.constant 0 : index
    %c0_16 = arith.constant 0 : index
    %17 = vector.load %arg7[%c0_15, %c0_16] : memref<1x128xf32, #tpu.memory_space<vmem>>, vector<1x128xf32>
    %18 = vector.broadcast %17 : vector<1x128xf32> to vector<8x128xf32>
    %19 = arith.addf %16, %18 : vector<8x128xf32>
    %20 = math.tanh %19 : vector<8x128xf32>
    %cst_17 = arith.constant 1.000000e+00 : f32
    %21 = vector.broadcast %cst_17 : f32 to vector<8x128xf32>
    %22 = arith.mulf %21, %20 : vector<8x128xf32>
    %c0_18 = arith.constant 0 : index
    %c0_19 = arith.constant 0 : index
    %23 = vector.load %arg8[%c0_18, %c0_19] : memref<8x128xf32, #tpu.memory_space<vmem>>, vector<8x128xf32>
    tpu.vector_store %arg8[%c0_18, %c0_19], %22 {strides = array<i32>} : memref<8x128xf32, #tpu.memory_space<vmem>>, vector<8x128xf32>,
    return
  }
  func.func @transform_0(%arg0: i32) -> (i32, i32) {
    %c0_i32 = arith.constant 0 : i32
    %c0_i32_0 = arith.constant 0 : i32
    return %arg0, %c0_i32 : i32, i32
  }
  func.func @transform_1(%arg0: i32) -> (i32, i32) {
    %c0_i32 = arith.constant 0 : i32
    %c0_i32_0 = arith.constant 0 : i32
    %c0_i32_1 = arith.constant 0 : i32
    return %c0_i32, %c0_i32_0 : i32, i32
  }
  func.func @transform_2(%arg0: i32) -> (i32, i32) {
    %c0_i32 = arith.constant 0 : i32
    %c0_i32_0 = arith.constant 0 : i32
    %c0_i32_1 = arith.constant 0 : i32
    return %c0_i32, %c0_i32_0 : i32, i32
  }
  func.func @transform_3(%arg0: i32) -> (i32, i32) {
    %c0_i32 = arith.constant 0 : i32
    %c0_i32_0 = arith.constant 0 : i32
    %c0_i32_1 = arith.constant 0 : i32
    return %c0_i32, %c0_i32_0 : i32, i32
  }
  func.func @transform_4(%arg0: i32) -> (i32, i32) {
    %c0_i32 = arith.constant 0 : i32
    %c0_i32_0 = arith.constant 0 : i32
    %c0_i32_1 = arith.constant 0 : i32
    return %c0_i32, %c0_i32_0 : i32, i32
  }
  func.func @transform_5(%arg0: i32) -> (i32, i32) {
    %c0_i32 = arith.constant 0 : i32
    %c0_i32_0 = arith.constant 0 : i32
    %c0_i32_1 = arith.constant 0 : i32
    return %c0_i32, %c0_i32_0 : i32, i32
  }
  func.func @transform_6(%arg0: i32) -> (i32, i32) {
    %c0_i32 = arith.constant 0 : i32
    %c0_i32_0 = arith.constant 0 : i32
    %c0_i32_1 = arith.constant 0 : i32
    return %c0_i32, %c0_i32_0 : i32, i32
  }
  func.func @transform_7(%arg0: i32) -> (i32, i32) {
    %c0_i32 = arith.constant 0 : i32
    %c0_i32_0 = arith.constant 0 : i32
    return %arg0, %c0_i32 : i32, i32
  }
}

</mosaic_0001>

<llo_original>
// kernel: tpu_custom_call.1
$region0: #{tpu_custom_call.1}
  #allocation0 [shape = 'u32[]', space=smem, size = 0x4, offset = 0x4, fixed_abs, tag = 'smem constant byte address 0x4 - core index']
  #allocation1 [shape = 'u32[144,128]{1,0:T(1,128)}', space=vmem, size = 0x12000, scoped, tag = 'internal scratch']
  %s0 = inlined_call_operand.hbm [shape: f32[8,17], index: 0, kind: input, shape index: {}]
  %s1 = inlined_call_operand.hbm [shape: f32[17,256], index: 1, kind: input, shape index: {}]
  %s2 = inlined_call_operand.vmem [shape: f32[1,256], index: 2, kind: input, shape index: {}]
  %s3 = inlined_call_operand.hbm [shape: f32[256,256], index: 3, kind: input, shape index: {}]
  %s4 = inlined_call_operand.vmem [shape: f32[1,256], index: 4, kind: input, shape index: {}]
  %s5 = inlined_call_operand.hbm [shape: f32[256,128], index: 5, kind: input, shape index: {}]
  %s6 = inlined_call_operand.vmem [shape: f32[1,128], index: 6, kind: input, shape index: {}]
  %s7 = inlined_call_operand.hbm [shape: f32[8,128], index: 7, kind: output, shape index: {}]
  %s8 = sld [smem:[#allocation0]]
  $region54: #{tpu_custom_call.1} parent=0
    _
  %s10 = ssub.s32 1, %s8
  %s11 = scalar_select 0, %s10, %s8
  $region1: #{tpu_custom_call.1} parent=0
    #allocation2 [shape = 'u8[4096]{0}', space=vmem, size = 0x1000, scoped, tag = 'input window, operand 0, single buffered']
    #allocation3 [shape = 's32[1]{0}', space=sflag, size = 0x4, scoped, tag = 'scoped memory for tpu_custom_call.1']
    #allocation4 [shape = 's32[1]{0}', space=sflag, size = 0x4, scoped, tag = 'scoped memory for tpu_custom_call.1']
    #allocation5 [shape = 'u8[24576]{0}', space=vmem, size = 0x6000, scoped, tag = 'input window, operand 1, single buffered']
    #allocation6 [shape = 's32[1]{0}', space=sflag, size = 0x4, scoped, tag = 'scoped memory for tpu_custom_call.1']
    #allocation7 [shape = 'u8[262144]{0}', space=vmem, size = 0x40000, scoped, tag = 'input window, operand 3, single buffered']
    #allocation8 [shape = 'u8[131072]{0}', space=vmem, size = 0x20000, scoped, tag = 'input window, operand 5, single buffered']
    #allocation9 [shape = 's32[1]{0}', space=sflag, size = 0x4, scoped, tag = 'scoped memory for tpu_custom_call.1']
    #allocation10 [shape = 'u8[4096]{0}', space=vmem, size = 0x1000, scoped, tag = 'output window, operand 0, single buffered']
    %12 = vsyncpa [#allocation3], 0
    %13 = vsyncpa [#allocation6], 0
    %14 = vsyncpa [#allocation9], 0
    %15 = vsyncpa [#allocation4], 0
    // Predicated region
    $region2: #{tpu_custom_call.1} parent=1 // pred_check
      _
    $region3: #{tpu_custom_call.1} parent=1 // pred_check_branch
      %17 = sbr.rel (0) target = $region5
    $region4: #{tpu_custom_call.1} parent=1 // pred_region
      %s19 = ssub.s32 128, 128
      %20 = vsyncadd [#allocation3], %s19
      %s22 = sshll.u32 [#allocation2], 4
      %s23 = int_to_ptr.vmem [resolvable:$true] %s22
      %25 = dma.hbm_to_vmem [thread:$0]  %s0, 128, %s23, [#allocation3]
    $region5: #{tpu_custom_call.1} parent=1 // pred_fallthru
      _
    // Predicated region
    $region6: #{tpu_custom_call.1} parent=1 // pred_check
      _
    $region7: #{tpu_custom_call.1} parent=1 // pred_check_branch
      %27 = sbr.rel (0) target = $region9
    $region8: #{tpu_custom_call.1} parent=1 // pred_region
      %s29 = ssub.s32 768, 768
      %30 = vsyncadd [#allocation6], %s29
      %s31 = sshll.u32 [#allocation5], 4
      %s32 = int_to_ptr.vmem [resolvable:$true] %s31
      %37 = dma.hbm_to_vmem [thread:$0]  %s1, 768, %s32, [#allocation6], 256, 256, 16
    $region9: #{tpu_custom_call.1} parent=1 // pred_fallthru
      _
    // Predicated region
    $region10: #{tpu_custom_call.1} parent=1 // pred_check
      _
    $region11: #{tpu_custom_call.1} parent=1 // pred_check_branch
      %39 = sbr.rel (0) target = $region13
    $region12: #{tpu_custom_call.1} parent=1 // pred_region
      _
    $region13: #{tpu_custom_call.1} parent=1 // pred_fallthru
      _
    // Predicated region
    $region14: #{tpu_custom_call.1} parent=1 // pred_check
      _
    $region15: #{tpu_custom_call.1} parent=1 // pred_check_branch
      %41 = sbr.rel (0) target = $region17
    $region16: #{tpu_custom_call.1} parent=1 // pred_region
      %s43 = ssub.s32 8192, 8192
      %44 = vsyncadd [#allocation6], %s43
      %s45 = sshll.u32 [#allocation7], 4
      %s46 = int_to_ptr.vmem [resolvable:$true] %s45
      %51 = dma.hbm_to_vmem [thread:$0]  %s3, 8192, %s46, [#allocation6], 256, 256, 16
    $region17: #{tpu_custom_call.1} parent=1 // pred_fallthru
      _
    // Predicated region
    $region18: #{tpu_custom_call.1} parent=1 // pred_check
      _
    $region19: #{tpu_custom_call.1} parent=1 // pred_check_branch
      %53 = sbr.rel (0) target = $region21
    $region20: #{tpu_custom_call.1} parent=1 // pred_region
      _
    $region21: #{tpu_custom_call.1} parent=1 // pred_fallthru
      _
    // Predicated region
    $region22: #{tpu_custom_call.1} parent=1 // pred_check
      _
    $region23: #{tpu_custom_call.1} parent=1 // pred_check_branch
      %55 = sbr.rel (0) target = $region25
    $region24: #{tpu_custom_call.1} parent=1 // pred_region
      %s57 = ssub.s32 4096, 4096
      %58 = vsyncadd [#allocation9], %s57
      %s59 = sshll.u32 [#allocation8], 4
      %s60 = int_to_ptr.vmem [resolvable:$true] %s59
      %65 = dma.hbm_to_vmem [thread:$0]  %s5, 4096, %s60, [#allocation9], 128, 128, 8
    $region25: #{tpu_custom_call.1} parent=1 // pred_fallthru
      _
    // Predicated region
    $region26: #{tpu_custom_call.1} parent=1 // pred_check
      _
    $region27: #{tpu_custom_call.1} parent=1 // pred_check_branch
      %67 = sbr.rel (0) target = $region29
    $region28: #{tpu_custom_call.1} parent=1 // pred_region
      _
    $region29: #{tpu_custom_call.1} parent=1 // pred_fallthru
      _
    // Predicated region
    $region30: #{tpu_custom_call.1} parent=1 // pred_check
      _
    $region31: #{tpu_custom_call.1} parent=1 // pred_check_branch
      %69 = sbr.rel (0) target = $region33
    $region32: #{tpu_custom_call.1} parent=1 // pred_region
      %70 = dma.done [#allocation3], 128
    $region33: #{tpu_custom_call.1} parent=1 // pred_fallthru
      _
    // Predicated region
    $region34: #{tpu_custom_call.1} parent=1 // pred_check
      _
    $region35: #{tpu_custom_call.1} parent=1 // pred_check_branch
      %72 = sbr.rel (0) target = $region37
    $region36: #{tpu_custom_call.1} parent=1 // pred_region
      %73 = dma.done [#allocation6], 768
    $region37: #{tpu_custom_call.1} parent=1 // pred_fallthru
      _
    // Predicated region
    $region38: #{tpu_custom_call.1} parent=1 // pred_check
      _
    $region39: #{tpu_custom_call.1} parent=1 // pred_check_branch
      %75 = sbr.rel (0) target = $region41
    $region40: #{tpu_custom_call.1} parent=1 // pred_region
      %76 = dma.done [#allocation6], 8192
    $region41: #{tpu_custom_call.1} parent=1 // pred_fallthru
      _
    // Predicated region
    $region42: #{tpu_custom_call.1} parent=1 // pred_check
      _
    $region43: #{tpu_custom_call.1} parent=1 // pred_check_branch
      %78 = sbr.rel (0) target = $region45
    $region44: #{tpu_custom_call.1} parent=1 // pred_region
      %79 = dma.done [#allocation9], 4096
    $region45: #{tpu_custom_call.1} parent=1 // pred_fallthru
      _
    %v80 = vld [vmem:[#allocation2] sm:$0xff]
    %v81 = vld [vmem:[#allocation5] sm:$0xff]
    %v82 = vld [vmem:[#allocation5 + $0x8] sm:$0xff]
    %v83 = vld [vmem:[#allocation5 + $0x10] sm:$0xff]
    %v84 = vld [vmem:[#allocation5 + $0x18] sm:$0xff]
    %v85 = vld [vmem:[#allocation5 + $0x20] sm:$0x1]
    %v86 = vld [vmem:[#allocation5 + $0x28] sm:$0x1]
    %v87 = vld [vmem:[%s2] sm:$0x3]
    %v89 = vlaneseq
    %v90 = vshrl.u32 %v89, 7
    %v91 = vsub.s32 0, %v90
    %v92 = vrot.slane %v87, %v91
    %v93 = vlaneseq
    %v94 = vshrl.u32 %v93, 7
    %v95 = vsub.s32 1, %v94
    %v96 = vrot.slane %v87, %v95
    %vm99 = vcmask 138240
    %v101 = vsel %vm99, %v80, 0
    %vm103 = vcmask 1040384
    %v105 = vsel %vm103, %v85, 0
    %v108 = vsel %vm103, %v86, 0
    %110 = vmatprep.subr.mxu0 %v82
    %111 = vmatpush1.msra.mxu0 %v81
    %112 = vmatprep.subr.mxu0 %v84
    %113 = vmatpush1.msra.mxu0 %v83
    %114 = vmatprep.subr.mxu0 %v108
    %115 = vmatpush1.msra.mxu0 %v105
    %116 = vmatprep.subr.mxu0 0.0
    %117 = vmatpush1.msra.mxu0 0.0
    %118 = vmatprep.subr.mxu0 0.0
    %119 = vmatpush1.msra.mxu0 0.0
    %120 = vmatprep.subr.mxu0 0.0
    %121 = vmatpush1.msra.mxu0 0.0
    %122 = vmatprep.subr.mxu0 0.0
    %123 = vmatpush1.msra.mxu0 0.0
    %124 = vmatprep.subr.mxu0 0.0
    %125 = vmatpush1.msra.mxu0 0.0
    %126 = vmatprep.subr.mxu0 0.0
    %127 = vmatpush1.msra.mxu0 0.0
    %128 = vmatprep.subr.mxu0 0.0
    %129 = vmatpush1.msra.mxu0 0.0
    %130 = vmatprep.subr.mxu0 0.0
    %131 = vmatpush1.msra.mxu0 0.0
    %132 = vmatprep.subr.mxu0 0.0
    %133 = vmatpush1.msra.mxu0 0.0
    %134 = vmatprep.subr.mxu0 0.0
    %135 = vmatpush1.msra.mxu0 0.0
    %136 = vmatprep.subr.mxu0 0.0
    %137 = vmatpush1.msra.mxu0 0.0
    %138 = vmatprep.subr.mxu0 0.0
    %139 = vmatpush1.msra.mxu0 0.0
    %140 = vmatprep.subr.mxu0 0.0
    %141 = vmatpush1.msra.mxu0 0.0
    %142 = vmatprep.subr.mxu0 0.0
    %143 = vmatpush1.msra.mxu0 0.0
    %144 = vmatprep.subr.mxu0 0.0
    %145 = vmatpush1.msra.mxu0 0.0
    %146 = vmatprep.subr.mxu0 0.0
    %147 = vmatpush1.msra.mxu0 0.0
    %148 = vmatprep.subr.mxu0 0.0
    %149 = vmatpush1.msra.mxu0 0.0
    %150 = vmatprep.subr.mxu0 0.0
    %151 = vmatpush1.msra.mxu0 0.0
    %152 = vmatprep.subr.mxu0 0.0
    %153 = vmatpush1.msra.mxu0 0.0
    %154 = vmatprep.subr.mxu0 0.0
    %155 = vmatpush1.msra.mxu0 0.0
    %156 = vmatprep.subr.mxu0 0.0
    %157 = vmatpush1.msra.mxu0 0.0
    %158 = vmatprep.subr.mxu0 0.0
    %159 = vmatpush1.msra.mxu0 0.0
    %160 = vmatprep.subr.mxu0 0.0
    %161 = vmatpush1.msra.mxu0 0.0
    %162 = vmatprep.subr.mxu0 0.0
    %163 = vmatpush1.msra.mxu0 0.0
    %164 = vmatprep.subr.mxu0 0.0
    %165 = vmatpush1.msra.mxu0 0.0
    %166 = vmatprep.subr.mxu0 0.0
    %167 = vmatpush1.msra.mxu0 0.0
    %168 = vmatprep.subr.mxu0 0.0
    %169 = vmatpush1.msra.mxu0 0.0
    %170 = vmatprep.subr.mxu0 0.0
    %171 = vmatpush1.msra.mxu0 0.0
    %172 = vmatprep.subr.mxu0 0.0
    %173 = vmatpush1.msra.mxu0 0.0
    %174 = vmatprep.mubr.f32.mxu0 0.0
    %175 = vmatmul.mubr.f32.gmra.mrb[0].mxu0 %v101
    %v176 = vpop.f32.mrb[0].mxu0
    %v177 = vadd.f32 %v92, %v176
    %v178 = vpop.f32.mrb[0].mxu0
    %v179 = vadd.f32 %v96, %v178
    %180 = vdwg.mxu0
    %v181 = vmax.f32 %v177, 0.0
    %v182 = vmax.f32 %v179, 0.0
    %v183 = vld [vmem:[#allocation7] sm:$0xff]
    %v184 = vld [vmem:[#allocation7 + $0x8] sm:$0xff]
    %v185 = vld [vmem:[#allocation7 + $0x10] sm:$0xff]
    %v186 = vld [vmem:[#allocation7 + $0x18] sm:$0xff]
    %v187 = vld [vmem:[#allocation7 + $0x20] sm:$0xff]
    %v188 = vld [vmem:[#allocation7 + $0x28] sm:$0xff]
    %v189 = vld [vmem:[#allocation7 + $0x30] sm:$0xff]
    %v190 = vld [vmem:[#allocation7 + $0x38] sm:$0xff]
    %v191 = vld [vmem:[#allocation7 + $0x40] sm:$0xff]
    %v192 = vld [vmem:[#allocation7 + $0x48] sm:$0xff]
    %v193 = vld [vmem:[#allocation7 + $0x50] sm:$0xff]
    %v194 = vld [vmem:[#allocation7 + $0x58] sm:$0xff]
    %v195 = vld [vmem:[#allocation7 + $0x60] sm:$0xff]
    %v196 = vld [vmem:[#allocation7 + $0x68] sm:$0xff]
    %v197 = vld [vmem:[#allocation7 + $0x70] sm:$0xff]
    %v198 = vld [vmem:[#allocation7 + $0x78] sm:$0xff]
    %v199 = vld [vmem:[#allocation7 + $0x80] sm:$0xff]
    %v200 = vld [vmem:[#allocation7 + $0x88] sm:$0xff]
    %v201 = vld [vmem:[#allocation7 + $0x90] sm:$0xff]
    %v202 = vld [vmem:[#allocation7 + $0x98] sm:$0xff]
    %v203 = vld [vmem:[#allocation7 + $0xa0] sm:$0xff]
    %v204 = vld [vmem:[#allocation7 + $0xa8] sm:$0xff]
    %v205 = vld [vmem:[#allocation7 + $0xb0] sm:$0xff]
    %v206 = vld [vmem:[#allocation7 + $0xb8] sm:$0xff]
    %v207 = vld [vmem:[#allocation7 + $0xc0] sm:$0xff]
    %v208 = vld [vmem:[#allocation7 + $0xc8] sm:$0xff]
    %v209 = vld [vmem:[#allocation7 + $0xd0] sm:$0xff]
    %v210 = vld [vmem:[#allocation7 + $0xd8] sm:$0xff]
    %v211 = vld [vmem:[#allocation7 + $0xe0] sm:$0xff]
    %v212 = vld [vmem:[#allocation7 + $0xe8] sm:$0xff]
    %v213 = vld [vmem:[#allocation7 + $0xf0] sm:$0xff]
    %v214 = vld [vmem:[#allocation7 + $0xf8] sm:$0xff]
    %v215 = vld [vmem:[#allocation7 + $0x100] sm:$0xff]
    %v216 = vld [vmem:[#allocation7 + $0x108] sm:$0xff]
    %v217 = vld [vmem:[#allocation7 + $0x110] sm:$0xff]
    %v218 = vld [vmem:[#allocation7 + $0x118] sm:$0xff]
    %v219 = vld [vmem:[#allocation7 + $0x120] sm:$0xff]
    %v220 = vld [vmem:[#allocation7 + $0x128] sm:$0xff]
    %v221 = vld [vmem:[#allocation7 + $0x130] sm:$0xff]
    %v222 = vld [vmem:[#allocation7 + $0x138] sm:$0xff]
    %v223 = vld [vmem:[#allocation7 + $0x140] sm:$0xff]
    %v224 = vld [vmem:[#allocation7 + $0x148] sm:$0xff]
    %v225 = vld [vmem:[#allocation7 + $0x150] sm:$0xff]
    %v226 = vld [vmem:[#allocation7 + $0x158] sm:$0xff]
    %v227 = vld [vmem:[#allocation7 + $0x160] sm:$0xff]
    %v228 = vld [vmem:[#allocation7 + $0x168] sm:$0xff]
    %v229 = vld [vmem:[#allocation7 + $0x170] sm:$0xff]
    %v230 = vld [vmem:[#allocation7 + $0x178] sm:$0xff]
    %v231 = vld [vmem:[#allocation7 + $0x180] sm:$0xff]
    %v232 = vld [vmem:[#allocation7 + $0x188] sm:$0xff]
    %v233 = vld [vmem:[#allocation7 + $0x190] sm:$0xff]
    %v234 = vld [vmem:[#allocation7 + $0x198] sm:$0xff]
    %v235 = vld [vmem:[#allocation7 + $0x1a0] sm:$0xff]
    %v236 = vld [vmem:[#allocation7 + $0x1a8] sm:$0xff]
    %v237 = vld [vmem:[#allocation7 + $0x1b0] sm:$0xff]
    %v238 = vld [vmem:[#allocation7 + $0x1b8] sm:$0xff]
    %v239 = vld [vmem:[#allocation7 + $0x1c0] sm:$0xff]
    %v240 = vld [vmem:[#allocation7 + $0x1c8] sm:$0xff]
    %v241 = vld [vmem:[#allocation7 + $0x1d0] sm:$0xff]
    %v242 = vld [vmem:[#allocation7 + $0x1d8] sm:$0xff]
    %v243 = vld [vmem:[#allocation7 + $0x1e0] sm:$0xff]
    %v244 = vld [vmem:[#allocation7 + $0x1e8] sm:$0xff]
    %v245 = vld [vmem:[#allocation7 + $0x1f0] sm:$0xff]
    %v246 = vld [vmem:[#allocation7 + $0x1f8] sm:$0xff]
    %v247 = vld [vmem:[%s4] sm:$0x3]
    %v249 = vlaneseq
    %v250 = vshrl.u32 %v249, 7
    %v251 = vsub.s32 0, %v250
    %v252 = vrot.slane %v247, %v251
    %v253 = vlaneseq
    %v254 = vshrl.u32 %v253, 7
    %v255 = vsub.s32 1, %v254
    %v256 = vrot.slane %v247, %v255
    %259 = vmatprep.subr.mxu0 %v184
    %260 = vmatpush1.msra.mxu0 %v183
    %261 = vmatprep.subr.mxu0 %v186
    %262 = vmatpush1.msra.mxu0 %v185
    %263 = vmatprep.subr.mxu0 %v188
    %264 = vmatpush1.msra.mxu0 %v187
    %265 = vmatprep.subr.mxu0 %v190
    %266 = vmatpush1.msra.mxu0 %v189
    %267 = vmatprep.subr.mxu0 %v192
    %268 = vmatpush1.msra.mxu0 %v191
    %269 = vmatprep.subr.mxu0 %v194
    %270 = vmatpush1.msra.mxu0 %v193
    %271 = vmatprep.subr.mxu0 %v196
    %272 = vmatpush1.msra.mxu0 %v195
    %273 = vmatprep.subr.mxu0 %v198
    %274 = vmatpush1.msra.mxu0 %v197
    %275 = vmatprep.subr.mxu0 %v200
    %276 = vmatpush1.msra.mxu0 %v199
    %277 = vmatprep.subr.mxu0 %v202
    %278 = vmatpush1.msra.mxu0 %v201
    %279 = vmatprep.subr.mxu0 %v204
    %280 = vmatpush1.msra.mxu0 %v203
    %281 = vmatprep.subr.mxu0 %v206
    %282 = vmatpush1.msra.mxu0 %v205
    %283 = vmatprep.subr.mxu0 %v208
    %284 = vmatpush1.msra.mxu0 %v207
    %285 = vmatprep.subr.mxu0 %v210
    %286 = vmatpush1.msra.mxu0 %v209
    %287 = vmatprep.subr.mxu0 %v212
    %288 = vmatpush1.msra.mxu0 %v211
    %289 = vmatprep.subr.mxu0 %v214
    %290 = vmatpush1.msra.mxu0 %v213
    %291 = vmatprep.subr.mxu0 %v216
    %292 = vmatpush1.msra.mxu0 %v215
    %293 = vmatprep.subr.mxu0 %v218
    %294 = vmatpush1.msra.mxu0 %v217
    %295 = vmatprep.subr.mxu0 %v220
    %296 = vmatpush1.msra.mxu0 %v219
    %297 = vmatprep.subr.mxu0 %v222
    %298 = vmatpush1.msra.mxu0 %v221
    %299 = vmatprep.subr.mxu0 %v224
    %300 = vmatpush1.msra.mxu0 %v223
    %301 = vmatprep.subr.mxu0 %v226
    %302 = vmatpush1.msra.mxu0 %v225
    %303 = vmatprep.subr.mxu0 %v228
    %304 = vmatpush1.msra.mxu0 %v227
    %305 = vmatprep.subr.mxu0 %v230
    %306 = vmatpush1.msra.mxu0 %v229
    %307 = vmatprep.subr.mxu0 %v232
    %308 = vmatpush1.msra.mxu0 %v231
    %309 = vmatprep.subr.mxu0 %v234
    %310 = vmatpush1.msra.mxu0 %v233
    %311 = vmatprep.subr.mxu0 %v236
    %312 = vmatpush1.msra.mxu0 %v235
    %313 = vmatprep.subr.mxu0 %v238
    %314 = vmatpush1.msra.mxu0 %v237
    %315 = vmatprep.subr.mxu0 %v240
    %316 = vmatpush1.msra.mxu0 %v239
    %317 = vmatprep.subr.mxu0 %v242
    %318 = vmatpush1.msra.mxu0 %v241
    %319 = vmatprep.subr.mxu0 %v244
    %320 = vmatpush1.msra.mxu0 %v243
    %321 = vmatprep.subr.mxu0 %v246
    %322 = vmatpush1.msra.mxu0 %v245
    %323 = vmatprep.mubr.f32.mxu0 %v182
    %324 = vmatmul.mubr.f32.gmra.mrb[0].mxu0 %v181
    %v325 = vpop.f32.mrb[0].mxu0
    %v326 = vadd.f32 %v252, %v325
    %v327 = vpop.f32.mrb[0].mxu0
    %v328 = vadd.f32 %v256, %v327
    %329 = vdwg.mxu0
    %v330 = vmax.f32 %v326, 0.0
    %v331 = vmax.f32 %v328, 0.0
    %v332 = vld [vmem:[#allocation8] sm:$0xff]
    %v333 = vld [vmem:[#allocation8 + $0x8] sm:$0xff]
    %v334 = vld [vmem:[#allocation8 + $0x10] sm:$0xff]
    %v335 = vld [vmem:[#allocation8 + $0x18] sm:$0xff]
    %v336 = vld [vmem:[#allocation8 + $0x20] sm:$0xff]
    %v337 = vld [vmem:[#allocation8 + $0x28] sm:$0xff]
    %v338 = vld [vmem:[#allocation8 + $0x30] sm:$0xff]
    %v339 = vld [vmem:[#allocation8 + $0x38] sm:$0xff]
    %v340 = vld [vmem:[#allocation8 + $0x40] sm:$0xff]
    %v341 = vld [vmem:[#allocation8 + $0x48] sm:$0xff]
    %v342 = vld [vmem:[#allocation8 + $0x50] sm:$0xff]
    %v343 = vld [vmem:[#allocation8 + $0x58] sm:$0xff]
    %v344 = vld [vmem:[#allocation8 + $0x60] sm:$0xff]
    %v345 = vld [vmem:[#allocation8 + $0x68] sm:$0xff]
    %v346 = vld [vmem:[#allocation8 + $0x70] sm:$0xff]
    %v347 = vld [vmem:[#allocation8 + $0x78] sm:$0xff]
    %v348 = vld [vmem:[#allocation8 + $0x80] sm:$0xff]
    %v349 = vld [vmem:[#allocation8 + $0x88] sm:$0xff]
    %v350 = vld [vmem:[#allocation8 + $0x90] sm:$0xff]
    %v351 = vld [vmem:[#allocation8 + $0x98] sm:$0xff]
    %v352 = vld [vmem:[#allocation8 + $0xa0] sm:$0xff]
    %v353 = vld [vmem:[#allocation8 + $0xa8] sm:$0xff]
    %v354 = vld [vmem:[#allocation8 + $0xb0] sm:$0xff]
    %v355 = vld [vmem:[#allocation8 + $0xb8] sm:$0xff]
    %v356 = vld [vmem:[#allocation8 + $0xc0] sm:$0xff]
    %v357 = vld [vmem:[#allocation8 + $0xc8] sm:$0xff]
    %v358 = vld [vmem:[#allocation8 + $0xd0] sm:$0xff]
    %v359 = vld [vmem:[#allocation8 + $0xd8] sm:$0xff]
    %v360 = vld [vmem:[#allocation8 + $0xe0] sm:$0xff]
    %v361 = vld [vmem:[#allocation8 + $0xe8] sm:$0xff]
    %v362 = vld [vmem:[#allocation8 + $0xf0] sm:$0xff]
    %v363 = vld [vmem:[#allocation8 + $0xf8] sm:$0xff]
    %v364 = vld [vmem:[%s6] sm:$0x1]
    %v366 = vlaneseq
    %v367 = vshrl.u32 %v366, 7
    %v368 = vsub.s32 0, %v367
    %v369 = vrot.slane %v364, %v368
    %371 = vmatprep.subr.mxu0 0.0
    %372 = vmatpush1.msra.mxu0 %v332
    %373 = vmatprep.subr.mxu0 0.0
    %374 = vmatpush1.msra.mxu0 %v333
    %375 = vmatprep.subr.mxu0 0.0
    %376 = vmatpush1.msra.mxu0 %v334
    %377 = vmatprep.subr.mxu0 0.0
    %378 = vmatpush1.msra.mxu0 %v335
    %379 = vmatprep.subr.mxu0 0.0
    %380 = vmatpush1.msra.mxu0 %v336
    %381 = vmatprep.subr.mxu0 0.0
    %382 = vmatpush1.msra.mxu0 %v337
    %383 = vmatprep.subr.mxu0 0.0
    %384 = vmatpush1.msra.mxu0 %v338
    %385 = vmatprep.subr.mxu0 0.0
    %386 = vmatpush1.msra.mxu0 %v339
    %387 = vmatprep.subr.mxu0 0.0
    %388 = vmatpush1.msra.mxu0 %v340
    %389 = vmatprep.subr.mxu0 0.0
    %390 = vmatpush1.msra.mxu0 %v341
    %391 = vmatprep.subr.mxu0 0.0
    %392 = vmatpush1.msra.mxu0 %v342
    %393 = vmatprep.subr.mxu0 0.0
    %394 = vmatpush1.msra.mxu0 %v343
    %395 = vmatprep.subr.mxu0 0.0
    %396 = vmatpush1.msra.mxu0 %v344
    %397 = vmatprep.subr.mxu0 0.0
    %398 = vmatpush1.msra.mxu0 %v345
    %399 = vmatprep.subr.mxu0 0.0
    %400 = vmatpush1.msra.mxu0 %v346
    %401 = vmatprep.subr.mxu0 0.0
    %402 = vmatpush1.msra.mxu0 %v347
    %403 = vmatprep.subr.mxu0 0.0
    %404 = vmatpush1.msra.mxu0 %v348
    %405 = vmatprep.subr.mxu0 0.0
    %406 = vmatpush1.msra.mxu0 %v349
    %407 = vmatprep.subr.mxu0 0.0
    %408 = vmatpush1.msra.mxu0 %v350
    %409 = vmatprep.subr.mxu0 0.0
    %410 = vmatpush1.msra.mxu0 %v351
    %411 = vmatprep.subr.mxu0 0.0
    %412 = vmatpush1.msra.mxu0 %v352
    %413 = vmatprep.subr.mxu0 0.0
    %414 = vmatpush1.msra.mxu0 %v353
    %415 = vmatprep.subr.mxu0 0.0
    %416 = vmatpush1.msra.mxu0 %v354
    %417 = vmatprep.subr.mxu0 0.0
    %418 = vmatpush1.msra.mxu0 %v355
    %419 = vmatprep.subr.mxu0 0.0
    %420 = vmatpush1.msra.mxu0 %v356
    %421 = vmatprep.subr.mxu0 0.0
    %422 = vmatpush1.msra.mxu0 %v357
    %423 = vmatprep.subr.mxu0 0.0
    %424 = vmatpush1.msra.mxu0 %v358
    %425 = vmatprep.subr.mxu0 0.0
    %426 = vmatpush1.msra.mxu0 %v359
    %427 = vmatprep.subr.mxu0 0.0
    %428 = vmatpush1.msra.mxu0 %v360
    %429 = vmatprep.subr.mxu0 0.0
    %430 = vmatpush1.msra.mxu0 %v361
    %431 = vmatprep.subr.mxu0 0.0
    %432 = vmatpush1.msra.mxu0 %v362
    %433 = vmatprep.subr.mxu0 0.0
    %434 = vmatpush1.msra.mxu0 %v363
    %435 = vmatprep.mubr.f32.mxu0 %v331
    %436 = vmatmul.mubr.f32.gmra.mrb[0].mxu0 %v330
    %v437 = vpop.f32.mrb[0].mxu0
    %v438 = vadd.f32 %v369, %v437
    %v439 = vpop.f32.mrb[0].mxu0
    %440 = vdwg.mxu0
    %v441 = vtanh.pop %v438
    %442 = vst [vmem:[#allocation10] sm:$0xff] %v441
    // Predicated region
    $region46: #{tpu_custom_call.1} parent=1 // pred_check
      _
    $region47: #{tpu_custom_call.1} parent=1 // pred_check_branch
      %444 = sbr.rel (0) target = $region49
    $region48: #{tpu_custom_call.1} parent=1 // pred_region
      %s446 = ssub.s32 128, 128
      %447 = vsyncadd [#allocation4], %s446
      %s449 = sshll.u32 [#allocation10], 4
      %s450 = int_to_ptr.vmem [resolvable:$true] %s449
      %452 = dma.vmem_to_hbm [thread:$0]  %s450, 128, %s7, [#allocation4]
    $region49: #{tpu_custom_call.1} parent=1 // pred_fallthru
      _
    // Predicated region
    $region50: #{tpu_custom_call.1} parent=1 // pred_check
      _
    $region51: #{tpu_custom_call.1} parent=1 // pred_check_branch
      %454 = sbr.rel (0) target = $region53
    $region52: #{tpu_custom_call.1} parent=1 // pred_region
      %455 = dma.done [#allocation4], 128
    $region53: #{tpu_custom_call.1} parent=1 // pred_fallthru
      _
    %456 = vsyncpa [#allocation3], 1
    %457 = vsyncpa [#allocation6], 1
    %458 = vsyncpa [#allocation9], 1
    %459 = vsyncpa [#allocation4], 1

</llo_original>
